<compile_context>
chip_gen: v7x
topology: tpu7x:2x2x1
jax: 0.10.0
libtpu: 0.0.40
codegen_flags: <defaults>
</compile_context>

<pallas_src>
import jax
import jax.numpy as jnp
from jax.experimental import pallas as pl
from jax.experimental.pallas import tpu as pltpu


def _gcn_fused_kernel(x_ref, w_ref, b_ref, o_ref):
    # x_ref : (tm, C_in*V)        bf16 activation row tile
    # w_ref : (C_in*V, C_out*W)   bf16 fused conv+graph weight (grid-invariant)
    # b_ref : (1, C_out*W)        f32 fused bias (grid-invariant)
    # o_ref : (tm, C_out*W)       lane-dense f32 output row tile
    y = jnp.dot(x_ref[...], w_ref[...], preferred_element_type=jnp.float32)
    o_ref[...] = (y + b_ref[...]).astype(o_ref.dtype)


def graph_convolution(x, weight, bias, A, *,
                      compute_dtype=jnp.bfloat16, row_tile_cap=1024):
    """ST-GCN graph conv forward.

    x: (N, C_in, T, V); weight: (K*C_out, C_in); bias: (K*C_out,); A: (K, V, W)
    returns: (N, C_out, T, W)
    """
    n, c_in, t, v = x.shape
    k, _, w_nodes = A.shape
    c_out = weight.shape[0] // k

    cv = c_in * v
    cw = c_out * w_nodes
    rows = n * t

    # ---- wrapper-side parameter fusion (tiny, data independent, kept in f32) ----
    w_kci = weight.reshape(k, c_out, c_in).astype(jnp.float32)
    a_f32 = A.astype(jnp.float32)
    w_eff = jnp.einsum('kci,kvw->ivcw', w_kci, a_f32).reshape(cv, cw)
    b_eff = jnp.einsum('kc,kvw->cw', bias.reshape(k, c_out).astype(jnp.float32),
                       a_f32).reshape(1, cw)

    # ---- lane-dense activation layout, N and T collapsed into one M axis ----
    # (Layout plumbing; at production sizes the producer should emit this layout
    #  directly and the consumer should absorb the output relayout.)
    x_flat = jnp.transpose(x, (0, 2, 1, 3)).reshape(rows, cv)

    # bf16 MXU operands; accumulation stays f32 inside the kernel.
    x_mm = x_flat.astype(compute_dtype)
    w_mm = w_eff.astype(compute_dtype)

    # ---- row tiling: biggest 8-aligned tile up to the cap ----
    if rows <= row_tile_cap:
        tm = ((rows + 7) // 8) * 8          # single grid step at small shapes
    else:
        tm = row_tile_cap
    rows_pad = pl.cdiv(rows, tm) * tm
    if rows_pad != rows:
        x_mm = jnp.pad(x_mm, ((0, rows_pad - rows), (0, 0)))

    out_flat = pl.pallas_call(
        _gcn_fused_kernel,
        out_shape=jax.ShapeDtypeStruct((rows_pad, cw), x.dtype),
        grid_spec=pltpu.PrefetchScalarGridSpec(
            num_scalar_prefetch=0,
            grid=(rows_pad // tm,),
            in_specs=[
                pl.BlockSpec((tm, cv), lambda i: (i, 0)),
                pl.BlockSpec((cv, cw), lambda i: (0, 0)),
                pl.BlockSpec((1, cw), lambda i: (0, 0)),
            ],
            out_specs=pl.BlockSpec((tm, cw), lambda i: (i, 0)),
        ),
        compiler_params=pltpu.CompilerParams(
            dimension_semantics=("parallel",)),
    )(x_mm, w_mm, b_eff)

    out_flat = out_flat[:rows]
    # (N*T, C_out*W) -> (N, C_out, T, W): pure layout plumbing in the wrapper.
    return jnp.transpose(out_flat.reshape(n, t, c_out, w_nodes), (0, 2, 1, 3))


def _reference(x, weight, bias, A):
    n, c_in, t, v = x.shape
    k = A.shape[0]
    c_out = weight.shape[0] // k
    y = jnp.einsum('oc,nctv->notv', weight, x) + bias[None, :, None, None]
    y = y.reshape(n, k, c_out, t, v)
    return jnp.einsum('nkctv,kvw->nctw', y, A)


if __name__ == "__main__":
    # Small shapes consistent with the module: N=2, C_in=4, C_out=8, K=3 graph
    # kernels, T=16 time steps, V=16 graph nodes.
    N, C_IN, C_OUT, K, T, V = 2, 4, 8, 3, 16, 16

    key = jax.random.PRNGKey(0)
    kx, kw, kb, ka = jax.random.split(key, 4)

    x = jax.random.normal(kx, (N, C_IN, T, V), dtype=jnp.float32)
    weight = 0.1 * jax.random.normal(kw, (C_OUT * K, C_IN), dtype=jnp.float32)
    bias = 0.1 * jax.random.normal(kb, (C_OUT * K,), dtype=jnp.float32)
    A = jax.random.uniform(ka, (K, V, V), dtype=jnp.float32)

    out = graph_convolution(x, weight, bias, A)
    out = jax.block_until_ready(out)

    ref = _reference(x, weight, bias, A)
    assert out.shape == (N, C_OUT, T, V), out.shape
    # bf16 matmul operands with f32 accumulation -> tolerance sized for bf16.
    assert jnp.allclose(out, ref, atol=5e-2, rtol=5e-2), \
        float(jnp.max(jnp.abs(out - ref)))

    print("KERNEL_OK")
</pallas_src>

<mosaic_0001>
module attributes {stable_mosaic.version = 11 : i64} {
  func.func @_gcn_fused_kernel(%arg0: i32, %arg1: memref<32x64xbf16, #tpu.memory_space<vmem>>, %arg2: memref<64x128xbf16, #tpu.memory_space<vmem>>, %arg3: memref<1x128xf32, #tpu.memory_space<vmem>>, %arg4: memref<32x128xf32, #tpu.memory_space<vmem>>) attributes {dimension_semantics = [#tpu.dimension_semantics<parallel>], iteration_bounds = array<i64: 1>, scalar_prefetch = 0 : i64, scratch_operands = 0 : i64, tpu.core_type = #tpu.core_type<tc>, window_params = [{transform_indices = @transform_0, window_bounds = array<i64: 32, 64>}, {pipeline_mode = #tpu.pipeline_mode<synchronous>, transform_indices = @transform_1, window_bounds = array<i64: 64, 128>}, {pipeline_mode = #tpu.pipeline_mode<synchronous>, transform_indices = @transform_2, window_bounds = array<i64: 1, 128>}, {transform_indices = @transform_3, window_bounds = array<i64: 32, 128>}]} {
    %c0 = arith.constant 0 : index
    %c0_0 = arith.constant 0 : index
    %0 = vector.load %arg1[%c0, %c0_0] : memref<32x64xbf16, #tpu.memory_space<vmem>>, vector<32x64xbf16>
    %c0_1 = arith.constant 0 : index
    %c0_2 = arith.constant 0 : index
    %1 = vector.load %arg2[%c0_1, %c0_2] : memref<64x128xbf16, #tpu.memory_space<vmem>>, vector<64x128xbf16>
    %cst = arith.constant dense<0.000000e+00> : vector<32x128xf32>
    %2 = tpu.matmul %0, %1, %cst {dimension_numbers = #tpu.dot_dimension_numbers<[1], [0], [0], [1], [0, 0, 1, 1], [], []>} : vector<32x64xbf16>, vector<64x128xbf16>, vector<32x128xf32> -> vector<32x128xf32>
    %c0_3 = arith.constant 0 : index
    %c0_4 = arith.constant 0 : index
    %3 = vector.load %arg3[%c0_3, %c0_4] : memref<1x128xf32, #tpu.memory_space<vmem>>, vector<1x128xf32>
    %4 = vector.broadcast %3 : vector<1x128xf32> to vector<32x128xf32>
    %5 = arith.addf %2, %4 : vector<32x128xf32>
    %c0_5 = arith.constant 0 : index
    %c0_6 = arith.constant 0 : index
    %6 = vector.load %arg4[%c0_5, %c0_6] : memref<32x128xf32, #tpu.memory_space<vmem>>, vector<32x128xf32>
    tpu.vector_store %arg4[%c0_5, %c0_6], %5 {strides = array<i32>} : memref<32x128xf32, #tpu.memory_space<vmem>>, vector<32x128xf32>,
    return
  }
  func.func @transform_0(%arg0: i32) -> (i32, i32) {
    %c0_i32 = arith.constant 0 : i32
    %c0_i32_0 = arith.constant 0 : i32
    return %arg0, %c0_i32 : i32, i32
  }
  func.func @transform_1(%arg0: i32) -> (i32, i32) {
    %c0_i32 = arith.constant 0 : i32
    %c0_i32_0 = arith.constant 0 : i32
    %c0_i32_1 = arith.constant 0 : i32
    return %c0_i32, %c0_i32_0 : i32, i32
  }
  func.func @transform_2(%arg0: i32) -> (i32, i32) {
    %c0_i32 = arith.constant 0 : i32
    %c0_i32_0 = arith.constant 0 : i32
    %c0_i32_1 = arith.constant 0 : i32
    return %c0_i32, %c0_i32_0 : i32, i32
  }
  func.func @transform_3(%arg0: i32) -> (i32, i32) {
    %c0_i32 = arith.constant 0 : i32
    %c0_i32_0 = arith.constant 0 : i32
    return %arg0, %c0_i32 : i32, i32
  }
}

</mosaic_0001>

<llo_original>
// kernel: tpu_custom_call.1
$region0: #{tpu_custom_call.1}
  #allocation0 [shape = 'u32[]', space=smem, size = 0x4, offset = 0x4, fixed_abs, tag = 'smem constant byte address 0x4 - core index']
  #allocation1 [shape = 'u32[144,128]{1,0:T(1,128)}', space=vmem, size = 0x12000, scoped, tag = 'internal scratch']
  %s0 = inlined_call_operand.hbm [shape: bf16[32,64], index: 0, kind: input, shape index: {}]
  %s1 = inlined_call_operand.hbm [shape: bf16[64,128], index: 1, kind: input, shape index: {}]
  %s2 = inlined_call_operand.vmem [shape: f32[1,128], index: 2, kind: input, shape index: {}]
  %s3 = inlined_call_operand.hbm [shape: f32[32,128], index: 3, kind: output, shape index: {}]
  %s4 = sld [smem:[#allocation0]]
  $region30: #{tpu_custom_call.1} parent=0
    _
  %s6 = ssub.s32 1, %s4
  %s7 = scalar_select 0, %s6, %s4
  $region1: #{tpu_custom_call.1} parent=0
    #allocation2 [shape = 'u8[8192]{0}', space=vmem, size = 0x2000, scoped, tag = 'input window, operand 0, single buffered']
    #allocation3 [shape = 's32[1]{0}', space=sflag, size = 0x4, scoped, tag = 'scoped memory for tpu_custom_call.1']
    #allocation4 [shape = 's32[1]{0}', space=sflag, size = 0x4, scoped, tag = 'scoped memory for tpu_custom_call.1']
    #allocation5 [shape = 'u8[16384]{0}', space=vmem, size = 0x4000, scoped, tag = 'input window, operand 1, single buffered']
    #allocation6 [shape = 's32[1]{0}', space=sflag, size = 0x4, scoped, tag = 'scoped memory for tpu_custom_call.1']
    #allocation7 [shape = 'u8[16384]{0}', space=vmem, size = 0x4000, scoped, tag = 'output window, operand 0, single buffered']
    %8 = vsyncpa [#allocation3], 0
    %9 = vsyncpa [#allocation6], 0
    %10 = vsyncpa [#allocation4], 0
    // Predicated region
    $region2: #{tpu_custom_call.1} parent=1 // pred_check
      _
    $region3: #{tpu_custom_call.1} parent=1 // pred_check_branch
      %12 = sbr.rel (0) target = $region5
    $region4: #{tpu_custom_call.1} parent=1 // pred_region
      %s14 = ssub.s32 256, 256
      %15 = vsyncadd [#allocation3], %s14
      %s16 = sshll.u32 [#allocation2], 4
      %s17 = int_to_ptr.vmem [resolvable:$true] %s16
      %22 = dma.hbm_to_vmem [thread:$0]  %s0, 256, %s17, [#allocation3], 64, 64, 4
    $region5: #{tpu_custom_call.1} parent=1 // pred_fallthru
      _
    // Predicated region
    $region6: #{tpu_custom_call.1} parent=1 // pred_check
      _
    $region7: #{tpu_custom_call.1} parent=1 // pred_check_branch
      %24 = sbr.rel (0) target = $region9
    $region8: #{tpu_custom_call.1} parent=1 // pred_region
      %s26 = ssub.s32 512, 512
      %27 = vsyncadd [#allocation6], %s26
      %s28 = sshll.u32 [#allocation5], 4
      %s29 = int_to_ptr.vmem [resolvable:$true] %s28
      %34 = dma.hbm_to_vmem [thread:$0]  %s1, 512, %s29, [#allocation6], 64, 64, 4
    $region9: #{tpu_custom_call.1} parent=1 // pred_fallthru
      _
    // Predicated region
    $region10: #{tpu_custom_call.1} parent=1 // pred_check
      _
    $region11: #{tpu_custom_call.1} parent=1 // pred_check_branch
      %36 = sbr.rel (0) target = $region13
    $region12: #{tpu_custom_call.1} parent=1 // pred_region
      _
    $region13: #{tpu_custom_call.1} parent=1 // pred_fallthru
      _
    // Predicated region
    $region14: #{tpu_custom_call.1} parent=1 // pred_check
      _
    $region15: #{tpu_custom_call.1} parent=1 // pred_check_branch
      %38 = sbr.rel (0) target = $region17
    $region16: #{tpu_custom_call.1} parent=1 // pred_region
      %39 = dma.done [#allocation3], 256
    $region17: #{tpu_custom_call.1} parent=1 // pred_fallthru
      _
    // Predicated region
    $region18: #{tpu_custom_call.1} parent=1 // pred_check
      _
    $region19: #{tpu_custom_call.1} parent=1 // pred_check_branch
      %41 = sbr.rel (0) target = $region21
    $region20: #{tpu_custom_call.1} parent=1 // pred_region
      %42 = dma.done [#allocation6], 512
    $region21: #{tpu_custom_call.1} parent=1 // pred_fallthru
      _
    %v44 = vld [vmem:[#allocation2] sm:$0xf]
    %v45 = vld [vmem:[#allocation2 + $0x4] sm:$0xf]
    %v46 = vld [vmem:[#allocation2 + $0x8] sm:$0xf]
    %v47 = vld [vmem:[#allocation2 + $0xc] sm:$0xf]
    %v48 = vld [vmem:[#allocation5] sm:$0xf]
    %v49 = vld [vmem:[#allocation5 + $0x4] sm:$0xf]
    %v50 = vld [vmem:[#allocation5 + $0x8] sm:$0xf]
    %v51 = vld [vmem:[#allocation5 + $0xc] sm:$0xf]
    %v52 = vld [vmem:[#allocation5 + $0x10] sm:$0xf]
    %v53 = vld [vmem:[#allocation5 + $0x14] sm:$0xf]
    %v54 = vld [vmem:[#allocation5 + $0x18] sm:$0xf]
    %v55 = vld [vmem:[#allocation5 + $0x1c] sm:$0xf]
    %v56 = vld [vmem:[%s2] sm:$0x1]
    %v58 = vlaneseq
    %v59 = vshrl.u32 %v58, 7
    %v60 = vsub.s32 0, %v59
    %v61 = vrot.slane %v56, %v60
    %v67 = vunpack.c.l.b16 %v44
    %v68 = vunpack.c.l.b16 %v45
    %v69 = vunpack.c.l.b16 %v46
    %v70 = vunpack.c.l.b16 %v47
    %v71 = vpack.c.b16 %v68, %v67
    %v72 = vpack.c.b16 %v70, %v69
    %v81 = vunpack.c.l.b16 %v48
    %v82 = vunpack.c.l.b16 %v49
    %v83 = vunpack.c.l.b16 %v50
    %v84 = vunpack.c.l.b16 %v51
    %v85 = vunpack.c.l.b16 %v52
    %v86 = vunpack.c.l.b16 %v53
    %v87 = vunpack.c.l.b16 %v54
    %v88 = vunpack.c.l.b16 %v55
    %v89 = vpack.c.b16 %v82, %v81
    %v90 = vpack.c.b16 %v84, %v83
    %v91 = vpack.c.b16 %v86, %v85
    %v92 = vpack.c.b16 %v88, %v87
    %vm97 = vcmask 523264
    %v99 = vsel %vm97, %v71, 0
    %v102 = vsel %vm97, %v72, 0
    %104 = vmatprep.subr.bf16.mxu0 0
    %105 = vmatpush1.bf16.msra.mxu0 %v89
    %106 = vmatprep.subr.bf16.mxu0 0
    %107 = vmatpush1.bf16.msra.mxu0 %v90
    %108 = vmatprep.subr.bf16.mxu0 0
    %109 = vmatpush1.bf16.msra.mxu0 %v91
    %110 = vmatprep.subr.bf16.mxu0 0
    %111 = vmatpush1.bf16.msra.mxu0 %v92
    %112 = vmatprep.subr.bf16.mxu0 0
    %113 = vmatpush1.bf16.msra.mxu0 0
    %114 = vmatprep.subr.bf16.mxu0 0
    %115 = vmatpush1.bf16.msra.mxu0 0
    %116 = vmatprep.subr.bf16.mxu0 0
    %117 = vmatpush1.bf16.msra.mxu0 0
    %118 = vmatprep.subr.bf16.mxu0 0
    %119 = vmatpush1.bf16.msra.mxu0 0
    %120 = vmatprep.subr.bf16.mxu0 0
    %121 = vmatpush1.bf16.msra.mxu0 0
    %122 = vmatprep.subr.bf16.mxu0 0
    %123 = vmatpush1.bf16.msra.mxu0 0
    %124 = vmatprep.subr.bf16.mxu0 0
    %125 = vmatpush1.bf16.msra.mxu0 0
    %126 = vmatprep.subr.bf16.mxu0 0
    %127 = vmatpush1.bf16.msra.mxu0 0
    %128 = vmatprep.subr.bf16.mxu0 0
    %129 = vmatpush1.bf16.msra.mxu0 0
    %130 = vmatprep.subr.bf16.mxu0 0
    %131 = vmatpush1.bf16.msra.mxu0 0
    %132 = vmatprep.subr.bf16.mxu0 0
    %133 = vmatpush1.bf16.msra.mxu0 0
    %134 = vmatprep.subr.bf16.mxu0 0
    %135 = vmatpush1.bf16.msra.mxu0 0
    %136 = vmatprep.mubr.bf16.mxu0 0
    %137 = vmatmul.mubr.bf16.gmra.mrb[0].mxu0 %v99
    %v138 = vpop.f32.mrb[0].mxu0
    %v139 = vadd.f32 %v61, %v138
    %v140 = vpop.f32.mrb[0].mxu0
    %v141 = vpop.f32.mrb[0].mxu0
    %v142 = vadd.f32 %v61, %v141
    %v143 = vpop.f32.mrb[0].mxu0
    %144 = vmatprep.mubr.bf16.mxu0 0
    %145 = vmatmul.mubr.bf16.gmra.mrb[0].mxu0 %v102
    %v146 = vpop.f32.mrb[0].mxu0
    %v147 = vadd.f32 %v61, %v146
    %v148 = vpop.f32.mrb[0].mxu0
    %v149 = vpop.f32.mrb[0].mxu0
    %v150 = vadd.f32 %v61, %v149
    %v151 = vpop.f32.mrb[0].mxu0
    %152 = vdwg.mxu0
    %153 = vst [vmem:[#allocation7] sm:$0xff] %v139
    %154 = vst [vmem:[#allocation7 + $0x8] sm:$0xff] %v142
    %155 = vst [vmem:[#allocation7 + $0x10] sm:$0xff] %v147
    %156 = vst [vmem:[#allocation7 + $0x18] sm:$0xff] %v150
    // Predicated region
    $region22: #{tpu_custom_call.1} parent=1 // pred_check
      _
    $region23: #{tpu_custom_call.1} parent=1 // pred_check_branch
      %158 = sbr.rel (0) target = $region25
    $region24: #{tpu_custom_call.1} parent=1 // pred_region
      %s160 = ssub.s32 512, 512
      %161 = vsyncadd [#allocation4], %s160
      %s162 = sshll.u32 [#allocation7], 4
      %s163 = int_to_ptr.vmem [resolvable:$true] %s162
      %168 = dma.vmem_to_hbm [thread:$0]  %s163, 512, %s3, [#allocation4], 128, 128, 8
    $region25: #{tpu_custom_call.1} parent=1 // pred_fallthru
      _
    // Predicated region
    $region26: #{tpu_custom_call.1} parent=1 // pred_check
      _
    $region27: #{tpu_custom_call.1} parent=1 // pred_check_branch
      %170 = sbr.rel (0) target = $region29
    $region28: #{tpu_custom_call.1} parent=1 // pred_region
      %171 = dma.done [#allocation4], 512
    $region29: #{tpu_custom_call.1} parent=1 // pred_fallthru
      _
    %172 = vsyncpa [#allocation3], 1
    %173 = vsyncpa [#allocation6], 1
    %174 = vsyncpa [#allocation4], 1

</llo_original>
